<compile_context>
chip_gen: v6e
topology: v6e:2x2x1
jax: 0.10.0
libtpu: 0.0.40
codegen_flags: <defaults>
</compile_context>

<pallas_src>
import functools

import jax
import jax.numpy as jnp
from jax.experimental import pallas as pl
from jax.experimental.pallas import tpu as pltpu


# ---------------------------------------------------------------------------
# Kernels
# ---------------------------------------------------------------------------

def _ca_fullslab_kernel(x_ref, wa_ref, wb_ref, o_ref, *, channels_last, inv_hw, nb):
    """Single-pass kernel over a block of NB batches.

    channels_last=False: x_ref (NB, C, HW),  wa = w1 (C_red, C), wb = w2 (C, C_red)
    channels_last=True : x_ref (NB, HW, C),  wa = w1.T (C, C_red), wb = w2.T (C_red, C)

    All per-batch math stays 2-D (static unroll over NB) so no lane<->sublane
    relayout is needed; the 2*NB pooled vectors go through one matmul pair.
    """
    wa = wa_ref[...].astype(jnp.float32)
    wb = wb_ref[...].astype(jnp.float32)
    red_axis = 0 if channels_last else 1   # HW axis of each 2-D slab

    # --- pooling: avg (f32 accumulation) + max (exact in native dtype) ---
    pooled_parts = []
    for b in range(nb):
        xb = x_ref[b]                                   # (HW, C) or (C, HW)
        s = jnp.sum(xb, axis=red_axis, keepdims=True, dtype=jnp.float32)
        mx = jnp.max(xb, axis=red_axis, keepdims=True).astype(jnp.float32)
        pooled_parts.append(s * inv_hw)                 # index 2b   : avg
        pooled_parts.append(mx)                         # index 2b+1 : max
    pooled = jnp.concatenate(pooled_parts, axis=red_axis)   # (2*NB, C) or (C, 2*NB)

    # --- shared MLP, all 2*NB pooled vectors in one matmul pair ---
    if channels_last:
        h = jnp.maximum(jnp.dot(pooled, wa, preferred_element_type=jnp.float32), 0.0)
        g = jnp.dot(h, wb, preferred_element_type=jnp.float32)        # (2*NB, C)
    else:
        h = jnp.maximum(jnp.dot(wa, pooled, preferred_element_type=jnp.float32), 0.0)
        g = jnp.dot(wb, h, preferred_element_type=jnp.float32)        # (C, 2*NB)

    # --- sigmoid gate + broadcast multiply, per batch ---
    for b in range(nb):
        if channels_last:
            gate = jax.nn.sigmoid(g[2 * b:2 * b + 1, :] + g[2 * b + 1:2 * b + 2, :])  # (1, C)
        else:
            gate = jax.nn.sigmoid(g[:, 2 * b:2 * b + 1] + g[:, 2 * b + 1:2 * b + 2])  # (C, 1)
        xb = x_ref[b]
        o_ref[b] = (xb * gate.astype(xb.dtype)).astype(o_ref.dtype)


def _ca_pool_gate_kernel(x_ref, w1_ref, w2_ref, gate_ref, sum_sc, max_sc, *,
                         hw, t_hw, inv_hw):
    """Two-phase fallback, phase 1: accumulate sum/max over HW tiles, then run
    the MLP + sigmoid on the last tile.  x_ref: (C, t_hw); gate_ref: (C, 1)."""
    t = pl.program_id(1)

    @pl.when(t == 0)
    def _():
        sum_sc[...] = jnp.zeros_like(sum_sc)
        max_sc[...] = jnp.full_like(max_sc, -jnp.inf)

    xf = x_ref[...].astype(jnp.float32)                         # (C, t_hw) tile
    lane = jax.lax.broadcasted_iota(jnp.int32, xf.shape, 1)
    valid = (t * t_hw + lane) < hw                              # mask padded tail
    sum_sc[...] += jnp.sum(jnp.where(valid, xf, 0.0), axis=1, keepdims=True)
    max_sc[...] = jnp.maximum(
        max_sc[...],
        jnp.max(jnp.where(valid, xf, -jnp.inf), axis=1, keepdims=True))

    @pl.when(t == pl.num_programs(1) - 1)
    def _():
        w1 = w1_ref[...].astype(jnp.float32)                    # (C_red, C)
        w2 = w2_ref[...].astype(jnp.float32)                    # (C, C_red)
        pooled = jnp.concatenate([sum_sc[...] * inv_hw, max_sc[...]], axis=1)  # (C, 2)
        h = jnp.maximum(jnp.dot(w1, pooled, preferred_element_type=jnp.float32), 0.0)
        g = jnp.dot(w2, h, preferred_element_type=jnp.float32)                 # (C, 2)
        gate_ref[...] = jax.nn.sigmoid(g[:, 0:1] + g[:, 1:2])                  # (C, 1)


def _ca_apply_gate_kernel(x_ref, gate_ref, o_ref):
    """Two-phase fallback, phase 2: out = x * gate (broadcast over HW tile)."""
    x = x_ref[...]
    o_ref[...] = (x * gate_ref[...].astype(x.dtype)).astype(o_ref.dtype)


# ---------------------------------------------------------------------------
# Wrapper helpers
# ---------------------------------------------------------------------------

def _pad_to(n, m):
    return ((n + m - 1) // m) * m


def _use_channels_last(C, HW):
    # vreg/VMEM footprint of one slab under each layout (sublanes pad to 8,
    # lanes pad to 128).  Pick the lane-dense / least-padded orientation.
    ch_first = _pad_to(C, 8) * _pad_to(HW, 128)    # (C, HW): HW on lanes
    ch_last = _pad_to(HW, 8) * _pad_to(C, 128)     # (HW, C): C on lanes
    return ch_last < ch_first


def _vmem_capacity_bytes():
    try:
        cap = getattr(pltpu.get_tpu_info(), "vmem_capacity_bytes", None)
        if cap:
            return int(cap)
    except Exception:
        pass
    return 64 * 1024 * 1024   # conservative default: v7x per-TensorCore VMEM


def _vmem_limit(need_bytes, capacity):
    # Generous headroom, never below 32 MiB, never above physical VMEM.
    return int(min(capacity, max(int(need_bytes * 1.25) + (1 << 20), 32 << 20)))


# ---------------------------------------------------------------------------
# Public entry point
# ---------------------------------------------------------------------------

def channel_attention(x, w1, w2, *, force_two_phase=False, force_t_hw=None,
                      vmem_budget_frac=0.7, max_batch_block=8):
    """CBAM channel attention.  x: (N, C, H, W); w1: (C//r, C); w2: (C, C//r)."""
    N, C, H, W = x.shape
    HW = H * W
    itemsize = jnp.dtype(x.dtype).itemsize
    w_bytes = (w1.size * jnp.dtype(w1.dtype).itemsize
               + w2.size * jnp.dtype(w2.dtype).itemsize)

    capacity = _vmem_capacity_bytes()
    budget = int(vmem_budget_frac * capacity)

    slab_bytes = C * HW * itemsize
    # per grid step: input slab + output slab, each double-buffered, + weights.
    single_pass_need = 4 * slab_bytes + 4 * w_bytes + (2 << 20)

    if not force_two_phase and single_pass_need <= budget:
        return _channel_attention_single_pass(x, w1, w2, budget, capacity,
                                              w_bytes, max_batch_block)
    return _channel_attention_two_phase(x, w1, w2, budget, capacity, w_bytes,
                                        force_t_hw)


def _channel_attention_single_pass(x, w1, w2, budget, capacity, w_bytes, max_nb):
    N, C, H, W = x.shape
    HW = H * W
    itemsize = jnp.dtype(x.dtype).itemsize
    channels_last = _use_channels_last(C, HW)
    slab_bytes = C * HW * itemsize

    # Batch blocking: largest divisor of N (<= max_nb) whose double-buffered
    # footprint fits the VMEM budget.  Amortizes per-grid-step overhead and
    # enlarges each DMA; divisor choice avoids partial batch blocks entirely.
    nb = 1
    for cand in range(min(N, max_nb), 0, -1):
        if N % cand == 0 and (4 * cand * slab_bytes + 4 * w_bytes + (2 << 20)) <= budget:
            nb = cand
            break
    need_bytes = 4 * nb * slab_bytes + 4 * w_bytes + (2 << 20)

    if channels_last:
        # Channels on lanes: lane-dense loads/stores when HW is small/ragged
        # (7x7, 14x14) and C is 128-aligned (256/512/... in ResNets).
        x2 = x.reshape(N, C, HW).transpose(0, 2, 1)             # (N, HW, C)
        wa, wb = w1.T, w2.T                                      # (C, C_red), (C_red, C)
        blk = (nb, HW, C)
    else:
        x2 = x.reshape(N, C, HW)                                 # (N, C, HW)
        wa, wb = w1, w2
        blk = (nb, C, HW)

    c_red = w1.shape[0]
    cost = pl.CostEstimate(
        flops=int(3 * N * C * HW + 8 * N * C * c_red),
        transcendentals=int(N * C),
        bytes_accessed=int(2 * N * C * HW * itemsize
                           + (w1.size + w2.size) * itemsize),
    )

    kernel = functools.partial(_ca_fullslab_kernel,
                               channels_last=channels_last,
                               inv_hw=1.0 / HW,
                               nb=nb)

    # TODO(synk): when N // nb < 2 on v7x (2 TensorCores) the single parallel
    # axis can't be split across cores; the two-phase path below has a second
    # parallel axis and load-balances better for tiny batches.
    out2 = pl.pallas_call(
        kernel,
        out_shape=jax.ShapeDtypeStruct(x2.shape, x.dtype),
        grid_spec=pltpu.PrefetchScalarGridSpec(
            num_scalar_prefetch=0,
            grid=(N // nb,),
            in_specs=[
                pl.BlockSpec(blk, lambda i: (i, 0, 0)),
                pl.BlockSpec(wa.shape, lambda i: (0, 0)),
                pl.BlockSpec(wb.shape, lambda i: (0, 0)),
            ],
            out_specs=pl.BlockSpec(blk, lambda i: (i, 0, 0)),
        ),
        compiler_params=pltpu.CompilerParams(
            dimension_semantics=("parallel",),
            vmem_limit_bytes=_vmem_limit(need_bytes, capacity)),
        cost_estimate=cost,
    )(x2, wa, wb)

    if channels_last:
        return out2.transpose(0, 2, 1).reshape(N, C, H, W)
    return out2.reshape(N, C, H, W)


def _channel_attention_two_phase(x, w1, w2, budget, capacity, w_bytes, force_t_hw):
    N, C, H, W = x.shape
    HW = H * W
    itemsize = jnp.dtype(x.dtype).itemsize
    x2 = x.reshape(N, C, HW)

    if force_t_hw is not None:
        t_hw = int(force_t_hw)
    else:
        # Phase-2 footprint per step: input tile + output tile, double-buffered.
        avail = max(budget - 4 * w_bytes - (4 << 20), 4 * C * itemsize * 128)
        t_hw = max(128, (avail // (4 * C * itemsize)) // 128 * 128)
    t_hw = min(t_hw, HW)          # full-extent block allowed even if not 128-aligned
    n_t = -(-HW // t_hw)

    c_red = w1.shape[0]
    x_blk = (pl.Squeezed(), C, t_hw)
    g_blk = (pl.Squeezed(), C, 1)

    # ---- phase 1: pooled statistics + MLP + sigmoid -> gate (N, C, 1) ----
    pool_kernel = functools.partial(_ca_pool_gate_kernel,
                                    hw=HW, t_hw=t_hw, inv_hw=1.0 / HW)
    phase1_need = 2 * C * t_hw * itemsize + 4 * w_bytes + 8 * C * 4 + (1 << 20)
    gate = pl.pallas_call(
        pool_kernel,
        out_shape=jax.ShapeDtypeStruct((N, C, 1), jnp.float32),
        grid_spec=pltpu.PrefetchScalarGridSpec(
            num_scalar_prefetch=0,
            grid=(N, n_t),
            in_specs=[
                pl.BlockSpec(x_blk, lambda n, t: (n, 0, t)),
                pl.BlockSpec(w1.shape, lambda n, t: (0, 0)),
                pl.BlockSpec(w2.shape, lambda n, t: (0, 0)),
            ],
            out_specs=pl.BlockSpec(g_blk, lambda n, t: (n, 0, 0)),
            scratch_shapes=[pltpu.VMEM((C, 1), jnp.float32),
                            pltpu.VMEM((C, 1), jnp.float32)],
        ),
        compiler_params=pltpu.CompilerParams(
            dimension_semantics=("parallel", "arbitrary"),
            vmem_limit_bytes=_vmem_limit(phase1_need, capacity)),
        cost_estimate=pl.CostEstimate(
            flops=int(2 * N * C * HW + 8 * N * C * c_red),
            transcendentals=int(N * C),
            bytes_accessed=int(N * C * HW * itemsize
                               + (w1.size + w2.size) * itemsize + N * C * 4)),
    )(x2, w1, w2)

    # ---- phase 2: out = x * gate, fully parallel over (N, HW tiles) ----
    phase2_need = 4 * C * t_hw * itemsize + 2 * C * 4 + (1 << 20)
    out2 = pl.pallas_call(
        _ca_apply_gate_kernel,
        out_shape=jax.ShapeDtypeStruct((N, C, HW), x.dtype),
        grid_spec=pltpu.PrefetchScalarGridSpec(
            num_scalar_prefetch=0,
            grid=(N, n_t),
            in_specs=[
                pl.BlockSpec(x_blk, lambda n, t: (n, 0, t)),
                pl.BlockSpec(g_blk, lambda n, t: (n, 0, 0)),
            ],
            out_specs=pl.BlockSpec(x_blk, lambda n, t: (n, 0, t)),
        ),
        compiler_params=pltpu.CompilerParams(
            dimension_semantics=("parallel", "parallel"),
            vmem_limit_bytes=_vmem_limit(phase2_need, capacity)),
        cost_estimate=pl.CostEstimate(
            flops=int(N * C * HW),
            transcendentals=0,
            bytes_accessed=int(2 * N * C * HW * itemsize + N * C * 4)),
    )(x2, gate)

    return out2.reshape(N, C, H, W)


# ---------------------------------------------------------------------------
# Pure-JAX reference (matches the PyTorch forward)
# ---------------------------------------------------------------------------

def channel_attention_ref(x, w1, w2):
    avg = jnp.mean(x, axis=(2, 3), keepdims=True)               # (N, C, 1, 1)
    mx = jnp.max(x, axis=(2, 3), keepdims=True)

    def mlp(p):
        h = jnp.einsum("rc,ncij->nrij", w1, p)
        h = jnp.maximum(h, 0.0)
        return jnp.einsum("cr,nrij->ncij", w2, h)

    out = mlp(avg) + mlp(mx)
    return jax.nn.sigmoid(out) * x


# ---------------------------------------------------------------------------
# Self-test
# ---------------------------------------------------------------------------

if __name__ == "__main__":
    key = jax.random.PRNGKey(0)

    def make_case(k, N, C, H, W, reduction=16):
        C_red = max(1, C // reduction)
        kx, ka, kb = jax.random.split(k, 3)
        x = jax.random.normal(kx, (N, C, H, W), dtype=jnp.float32)
        w1 = jax.random.normal(ka, (C_red, C), dtype=jnp.float32) * 0.1
        w2 = jax.random.normal(kb, (C, C_red), dtype=jnp.float32) * 0.1
        return x, w1, w2

    kA, kB, kC = jax.random.split(key, 3)

    # 1) Main small case: HW = 256 (lane-aligned) -> single pass,
    #    channels-first, batch block NB = 2.
    x, w1, w2 = make_case(kA, 2, 32, 16, 16)
    out = jax.block_until_ready(channel_attention(x, w1, w2))
    ref = channel_attention_ref(x, w1, w2)
    assert out.shape == x.shape
    assert jnp.allclose(out, ref, atol=1e-5, rtol=1e-5), "single-pass CF mismatch"

    # 2) HW = 49 (ragged), C = 128 (lane-aligned) -> single pass,
    #    channels-last, batch block NB = 2.
    x, w1, w2 = make_case(kB, 2, 128, 7, 7)
    out = jax.block_until_ready(channel_attention(x, w1, w2))
    ref = channel_attention_ref(x, w1, w2)
    assert jnp.allclose(out, ref, atol=1e-5, rtol=1e-5), "single-pass CL mismatch"

    # 3) Force the HW-tiled two-phase fallback (the path very large layers take
    #    on v7x's 64 MiB VMEM), including a ragged last tile (HW=144, tile=128).
    x, w1, w2 = make_case(kC, 2, 32, 12, 12)
    out = jax.block_until_ready(
        channel_attention(x, w1, w2, force_two_phase=True, force_t_hw=128))
    ref = channel_attention_ref(x, w1, w2)
    assert jnp.allclose(out, ref, atol=1e-5, rtol=1e-5), "two-phase mismatch"

    print("KERNEL_OK")
</pallas_src>

<mosaic_0001>
module attributes {stable_mosaic.version = 11 : i64} {
  func.func @_ca_fullslab_kernel(%arg0: i32, %arg1: memref<2x32x256xf32, #tpu.memory_space<vmem>>, %arg2: memref<2x32xf32, #tpu.memory_space<vmem>>, %arg3: memref<32x2xf32, #tpu.memory_space<vmem>>, %arg4: memref<2x32x256xf32, #tpu.memory_space<vmem>>) attributes {dimension_semantics = [#tpu.dimension_semantics<parallel>], iteration_bounds = array<i64: 1>, scalar_prefetch = 0 : i64, scratch_operands = 0 : i64, tpu.core_type = #tpu.core_type<tc>, window_params = [{transform_indices = @transform_0, window_bounds = array<i64: 2, 32, 256>}, {pipeline_mode = #tpu.pipeline_mode<synchronous>, transform_indices = @transform_1, window_bounds = array<i64: 2, 32>}, {pipeline_mode = #tpu.pipeline_mode<synchronous>, transform_indices = @transform_2, window_bounds = array<i64: 32, 2>}, {transform_indices = @transform_3, window_bounds = array<i64: 2, 32, 256>}]} {
    %c0 = arith.constant 0 : index
    %c0_0 = arith.constant 0 : index
    %0 = vector.load %arg2[%c0, %c0_0] : memref<2x32xf32, #tpu.memory_space<vmem>>, vector<2x32xf32>
    %c0_1 = arith.constant 0 : index
    %c0_2 = arith.constant 0 : index
    %1 = vector.load %arg3[%c0_1, %c0_2] : memref<32x2xf32, #tpu.memory_space<vmem>>, vector<32x2xf32>
    %c0_3 = arith.constant 0 : index
    %c0_4 = arith.constant 0 : index
    %c0_5 = arith.constant 0 : index
    %2 = vector.load %arg1[%c0_3, %c0_4, %c0_5] : memref<2x32x256xf32, #tpu.memory_space<vmem>>, vector<1x32x256xf32>
    %3 = vector.shape_cast %2 : vector<1x32x256xf32> to vector<32x256xf32>
    %cst = arith.constant dense<0.000000e+00> : vector<32xf32>
    %4 = vector.multi_reduction <add>, %3, %cst [1] : vector<32x256xf32> to vector<32xf32>
    %5 = vector.shape_cast %4 : vector<32xf32> to vector<32x1xf32>
    %cst_6 = arith.constant dense<0xFF800000> : vector<32xf32>
    %6 = vector.multi_reduction <maximumf>, %3, %cst_6 [1] : vector<32x256xf32> to vector<32xf32>
    %7 = vector.shape_cast %6 : vector<32xf32> to vector<32x1xf32>
    %cst_7 = arith.constant 3.906250e-03 : f32
    %8 = vector.broadcast %cst_7 : f32 to vector<32x1xf32>
    %9 = arith.mulf %5, %8 : vector<32x1xf32>
    %c1 = arith.constant 1 : index
    %c0_8 = arith.constant 0 : index
    %c0_9 = arith.constant 0 : index
    %10 = vector.load %arg1[%c1, %c0_8, %c0_9] : memref<2x32x256xf32, #tpu.memory_space<vmem>>, vector<1x32x256xf32>
    %11 = vector.shape_cast %10 : vector<1x32x256xf32> to vector<32x256xf32>
    %cst_10 = arith.constant dense<0.000000e+00> : vector<32xf32>
    %12 = vector.multi_reduction <add>, %11, %cst_10 [1] : vector<32x256xf32> to vector<32xf32>
    %13 = vector.shape_cast %12 : vector<32xf32> to vector<32x1xf32>
    %cst_11 = arith.constant dense<0xFF800000> : vector<32xf32>
    %14 = vector.multi_reduction <maximumf>, %11, %cst_11 [1] : vector<32x256xf32> to vector<32xf32>
    %15 = vector.shape_cast %14 : vector<32xf32> to vector<32x1xf32>
    %cst_12 = arith.constant 3.906250e-03 : f32
    %16 = vector.broadcast %cst_12 : f32 to vector<32x1xf32>
    %17 = arith.mulf %13, %16 : vector<32x1xf32>
    %18 = tpu.concatenate %9, %7, %17, %15 in 1 : vector<32x1xf32>, vector<32x1xf32>, vector<32x1xf32>, vector<32x1xf32> -> vector<32x4xf32>
    %cst_13 = arith.constant dense<0.000000e+00> : vector<2x4xf32>
    %19 = tpu.matmul %0, %18, %cst_13 {dimension_numbers = #tpu.dot_dimension_numbers<[1], [0], [0], [1], [0, 0, 1, 1], [], []>} : vector<2x32xf32>, vector<32x4xf32>, vector<2x4xf32> -> vector<2x4xf32>
    %cst_14 = arith.constant 0.000000e+00 : f32
    %20 = vector.broadcast %cst_14 : f32 to vector<2x4xf32>
    %21 = arith.maximumf %19, %20 : vector<2x4xf32>
    %cst_15 = arith.constant dense<0.000000e+00> : vector<32x4xf32>
    %22 = tpu.matmul %1, %21, %cst_15 {dimension_numbers = #tpu.dot_dimension_numbers<[1], [0], [0], [1], [0, 0, 1, 1], [], []>} : vector<32x2xf32>, vector<2x4xf32>, vector<32x4xf32> -> vector<32x4xf32>
    %23 = vector.extract_strided_slice %22 {offsets = [0, 0], sizes = [32, 1], strides = [1, 1]} : vector<32x4xf32> to vector<32x1xf32>
    %24 = vector.extract_strided_slice %22 {offsets = [0, 1], sizes = [32, 1], strides = [1, 1]} : vector<32x4xf32> to vector<32x1xf32>
    %25 = arith.addf %23, %24 : vector<32x1xf32>
    %26 = arith.negf %25 : vector<32x1xf32>
    %27 = math.exp %26 : vector<32x1xf32>
    %cst_16 = arith.constant 1.000000e+00 : f32
    %28 = vector.broadcast %cst_16 : f32 to vector<32x1xf32>
    %29 = arith.addf %28, %27 : vector<32x1xf32>
    %30 = arith.divf %28, %29 : vector<32x1xf32>
    %c0_17 = arith.constant 0 : index
    %c0_18 = arith.constant 0 : index
    %c0_19 = arith.constant 0 : index
    %31 = vector.load %arg1[%c0_17, %c0_18, %c0_19] : memref<2x32x256xf32, #tpu.memory_space<vmem>>, vector<1x32x256xf32>
    %32 = vector.shape_cast %31 : vector<1x32x256xf32> to vector<32x256xf32>
    %33 = vector.broadcast %30 : vector<32x1xf32> to vector<32x256xf32>
    %34 = arith.mulf %32, %33 : vector<32x256xf32>
    %c0_20 = arith.constant 0 : index
    %c0_21 = arith.constant 0 : index
    %c0_22 = arith.constant 0 : index
    %35 = vector.load %arg4[%c0_20, %c0_21, %c0_22] : memref<2x32x256xf32, #tpu.memory_space<vmem>>, vector<1x32x256xf32>
    %36 = vector.shape_cast %35 : vector<1x32x256xf32> to vector<32x256xf32>
    %37 = vector.shape_cast %34 : vector<32x256xf32> to vector<1x32x256xf32>
    tpu.vector_store %arg4[%c0_20, %c0_21, %c0_22], %37 {strides = array<i32>} : memref<2x32x256xf32, #tpu.memory_space<vmem>>, vector<1x32x256xf32>,
    %38 = vector.extract_strided_slice %22 {offsets = [0, 2], sizes = [32, 1], strides = [1, 1]} : vector<32x4xf32> to vector<32x1xf32>
    %39 = vector.extract_strided_slice %22 {offsets = [0, 3], sizes = [32, 1], strides = [1, 1]} : vector<32x4xf32> to vector<32x1xf32>
    %40 = arith.addf %38, %39 : vector<32x1xf32>
    %41 = arith.negf %40 : vector<32x1xf32>
    %42 = math.exp %41 : vector<32x1xf32>
    %cst_23 = arith.constant 1.000000e+00 : f32
    %43 = vector.broadcast %cst_23 : f32 to vector<32x1xf32>
    %44 = arith.addf %43, %42 : vector<32x1xf32>
    %45 = arith.divf %43, %44 : vector<32x1xf32>
    %c1_24 = arith.constant 1 : index
    %c0_25 = arith.constant 0 : index
    %c0_26 = arith.constant 0 : index
    %46 = vector.load %arg1[%c1_24, %c0_25, %c0_26] : memref<2x32x256xf32, #tpu.memory_space<vmem>>, vector<1x32x256xf32>
    %47 = vector.shape_cast %46 : vector<1x32x256xf32> to vector<32x256xf32>
    %48 = vector.broadcast %45 : vector<32x1xf32> to vector<32x256xf32>
    %49 = arith.mulf %47, %48 : vector<32x256xf32>
    %c1_27 = arith.constant 1 : index
    %c0_28 = arith.constant 0 : index
    %c0_29 = arith.constant 0 : index
    %50 = vector.load %arg4[%c1_27, %c0_28, %c0_29] : memref<2x32x256xf32, #tpu.memory_space<vmem>>, vector<1x32x256xf32>
    %51 = vector.shape_cast %50 : vector<1x32x256xf32> to vector<32x256xf32>
    %52 = vector.shape_cast %49 : vector<32x256xf32> to vector<1x32x256xf32>
    tpu.vector_store %arg4[%c1_27, %c0_28, %c0_29], %52 {strides = array<i32>} : memref<2x32x256xf32, #tpu.memory_space<vmem>>, vector<1x32x256xf32>,
    return
  }
  func.func @transform_0(%arg0: i32) -> (i32, i32, i32) {
    %c0_i32 = arith.constant 0 : i32
    %c0_i32_0 = arith.constant 0 : i32
    %c0_i32_1 = arith.constant 0 : i32
    return %arg0, %c0_i32, %c0_i32_0 : i32, i32, i32
  }
  func.func @transform_1(%arg0: i32) -> (i32, i32) {
    %c0_i32 = arith.constant 0 : i32
    %c0_i32_0 = arith.constant 0 : i32
    %c0_i32_1 = arith.constant 0 : i32
    return %c0_i32, %c0_i32_0 : i32, i32
  }
  func.func @transform_2(%arg0: i32) -> (i32, i32) {
    %c0_i32 = arith.constant 0 : i32
    %c0_i32_0 = arith.constant 0 : i32
    %c0_i32_1 = arith.constant 0 : i32
    return %c0_i32, %c0_i32_0 : i32, i32
  }
  func.func @transform_3(%arg0: i32) -> (i32, i32, i32) {
    %c0_i32 = arith.constant 0 : i32
    %c0_i32_0 = arith.constant 0 : i32
    %c0_i32_1 = arith.constant 0 : i32
    return %arg0, %c0_i32, %c0_i32_0 : i32, i32, i32
  }
}

</mosaic_0001>

<llo_original>
// kernel: tpu_custom_call.1
$region0: #{tpu_custom_call.1}
  #allocation0 [shape = 'u32[]', space=smem, size = 0x4, offset = 0x4, fixed_abs, tag = 'smem constant byte address 0x4 - core index']
  #allocation1 [shape = 'u32[144,128]{1,0:T(1,128)}', space=vmem, size = 0x12000, scoped, tag = 'internal scratch']
  %s0 = inlined_call_operand.hbm [shape: f32[2,32,256], index: 0, kind: input, shape index: {}]
  %s1 = inlined_call_operand.vmem [shape: f32[2,32], index: 1, kind: input, shape index: {}]
  %s2 = inlined_call_operand.vmem [shape: f32[32,2], index: 2, kind: input, shape index: {}]
  %s3 = inlined_call_operand.hbm [shape: f32[2,32,256], index: 3, kind: output, shape index: {}]
  %s4 = sld [smem:[#allocation0]]
  $region26: #{tpu_custom_call.1} parent=0
    _
  %s6 = ssub.s32 1, %s4
  %s7 = scalar_select 0, %s6, %s4
  $region1: #{tpu_custom_call.1} parent=0
    #allocation2 [shape = 'u8[65536]{0}', space=vmem, size = 0x10000, scoped, tag = 'input window, operand 0, single buffered']
    #allocation3 [shape = 's32[1]{0}', space=sflag, size = 0x4, scoped, tag = 'scoped memory for tpu_custom_call.1']
    #allocation4 [shape = 's32[1]{0}', space=sflag, size = 0x4, scoped, tag = 'scoped memory for tpu_custom_call.1']
    #allocation5 [shape = 'u8[65536]{0}', space=vmem, size = 0x10000, scoped, tag = 'output window, operand 0, single buffered']
    %8 = vsyncpa [#allocation3], 0
    %9 = vsyncpa [#allocation4], 0
    // Predicated region
    $region2: #{tpu_custom_call.1} parent=1 // pred_check
      _
    $region3: #{tpu_custom_call.1} parent=1 // pred_check_branch
      %11 = sbr.rel (0) target = $region5
    $region4: #{tpu_custom_call.1} parent=1 // pred_region
      %s13 = ssub.s32 2048, 2048
      %14 = vsyncadd [#allocation3], %s13
      %s15 = sshll.u32 [#allocation2], 4
      %s16 = int_to_ptr.vmem [resolvable:$true] %s15
      %21 = dma.hbm_to_vmem [thread:$0]  %s0, 2048, %s16, [#allocation3], 256, 256, 16
    $region5: #{tpu_custom_call.1} parent=1 // pred_fallthru
      _
    // Predicated region
    $region6: #{tpu_custom_call.1} parent=1 // pred_check
      _
    $region7: #{tpu_custom_call.1} parent=1 // pred_check_branch
      %23 = sbr.rel (0) target = $region9
    $region8: #{tpu_custom_call.1} parent=1 // pred_region
      _
    $region9: #{tpu_custom_call.1} parent=1 // pred_fallthru
      _
    // Predicated region
    $region10: #{tpu_custom_call.1} parent=1 // pred_check
      _
    $region11: #{tpu_custom_call.1} parent=1 // pred_check_branch
      %25 = sbr.rel (0) target = $region13
    $region12: #{tpu_custom_call.1} parent=1 // pred_region
      _
    $region13: #{tpu_custom_call.1} parent=1 // pred_fallthru
      _
    // Predicated region
    $region14: #{tpu_custom_call.1} parent=1 // pred_check
      _
    $region15: #{tpu_custom_call.1} parent=1 // pred_check_branch
      %27 = sbr.rel (0) target = $region17
    $region16: #{tpu_custom_call.1} parent=1 // pred_region
      %28 = dma.done [#allocation3], 2048
    $region17: #{tpu_custom_call.1} parent=1 // pred_fallthru
      _
    %v29 = vld [vmem:[%s1] sm:$0x3]
    %v30 = vld [vmem:[%s2] sm:$0xff]
    %v31 = vld [vmem:[%s2 + $0x8] sm:$0xff]
    %v32 = vld [vmem:[%s2 + $0x10] sm:$0xff]
    %v33 = vld [vmem:[%s2 + $0x18] sm:$0xff]
    %v34 = vld [vmem:[#allocation2] sm:$0xff]
    %v35 = vld [vmem:[#allocation2 + $0x8] sm:$0xff]
    %v36 = vld [vmem:[#allocation2 + $0x10] sm:$0xff]
    %v37 = vld [vmem:[#allocation2 + $0x18] sm:$0xff]
    %v38 = vld [vmem:[#allocation2 + $0x20] sm:$0xff]
    %v39 = vld [vmem:[#allocation2 + $0x28] sm:$0xff]
    %v40 = vld [vmem:[#allocation2 + $0x30] sm:$0xff]
    %v41 = vld [vmem:[#allocation2 + $0x38] sm:$0xff]
    %v42 = vadd.f32 %v34, %v35
    %43 = vadd.xlane.f32.xlu0 %v42
    %v44 = vpop.xlane.xlu0 %43
    %v45 = vadd.f32 %v36, %v37
    %46 = vadd.xlane.f32.xlu0 %v45
    %v47 = vpop.xlane.xlu0 %46
    %v48 = vadd.f32 %v38, %v39
    %49 = vadd.xlane.f32.xlu0 %v48
    %v50 = vpop.xlane.xlu0 %49
    %v51 = vadd.f32 %v40, %v41
    %52 = vadd.xlane.f32.xlu0 %v51
    %v53 = vpop.xlane.xlu0 %52
    %v54 = vmax.f32 %v34, %v35
    %55 = vmax.xlane.f32.xlu0 %v54
    %v56 = vpop.xlane.xlu0 %55
    %v57 = vmax.f32 %v36, %v37
    %58 = vmax.xlane.f32.xlu0 %v57
    %v59 = vpop.xlane.xlu0 %58
    %v60 = vmax.f32 %v38, %v39
    %61 = vmax.xlane.f32.xlu0 %v60
    %v62 = vpop.xlane.xlu0 %61
    %v63 = vmax.f32 %v40, %v41
    %64 = vmax.xlane.f32.xlu0 %v63
    %v65 = vpop.xlane.xlu0 %64
    %v66 = vmul.f32 %v44, 0.00390625
    %v67 = vmul.f32 %v47, 0.00390625
    %v68 = vmul.f32 %v50, 0.00390625
    %v69 = vmul.f32 %v53, 0.00390625
    %s70 = scalar_lea.vmem [#allocation2], 64
    %v71 = vld [vmem:[%s70] sm:$0xff]
    %v72 = vld [vmem:[%s70 + $0x8] sm:$0xff]
    %v73 = vld [vmem:[%s70 + $0x10] sm:$0xff]
    %v74 = vld [vmem:[%s70 + $0x18] sm:$0xff]
    %v75 = vld [vmem:[%s70 + $0x20] sm:$0xff]
    %v76 = vld [vmem:[%s70 + $0x28] sm:$0xff]
    %v77 = vld [vmem:[%s70 + $0x30] sm:$0xff]
    %v78 = vld [vmem:[%s70 + $0x38] sm:$0xff]
    %v79 = vadd.f32 %v71, %v72
    %80 = vadd.xlane.f32.xlu0 %v79
    %v81 = vpop.xlane.xlu0 %80
    %v82 = vadd.f32 %v73, %v74
    %83 = vadd.xlane.f32.xlu0 %v82
    %v84 = vpop.xlane.xlu0 %83
    %v85 = vadd.f32 %v75, %v76
    %86 = vadd.xlane.f32.xlu0 %v85
    %v87 = vpop.xlane.xlu0 %86
    %v88 = vadd.f32 %v77, %v78
    %89 = vadd.xlane.f32.xlu0 %v88
    %v90 = vpop.xlane.xlu0 %89
    %v91 = vmax.f32 %v71, %v72
    %92 = vmax.xlane.f32.xlu0 %v91
    %v93 = vpop.xlane.xlu0 %92
    %v94 = vmax.f32 %v73, %v74
    %95 = vmax.xlane.f32.xlu0 %v94
    %v96 = vpop.xlane.xlu0 %95
    %v97 = vmax.f32 %v75, %v76
    %98 = vmax.xlane.f32.xlu0 %v97
    %v99 = vpop.xlane.xlu0 %98
    %v100 = vmax.f32 %v77, %v78
    %101 = vmax.xlane.f32.xlu0 %v100
    %v102 = vpop.xlane.xlu0 %101
    %v103 = vmul.f32 %v81, 0.00390625
    %v104 = vmul.f32 %v84, 0.00390625
    %v105 = vmul.f32 %v87, 0.00390625
    %v106 = vmul.f32 %v90, 0.00390625
    %vm107 = vcmask 7168
    %v108 = vsel %vm107, %v66, %v56
    %v109 = vsel %vm107, %v67, %v59
    %v110 = vsel %vm107, %v68, %v62
    %v111 = vsel %vm107, %v69, %v65
    %vm112 = vcmask 15360
    %v113 = vsel %vm112, %v108, %v103
    %v114 = vsel %vm112, %v109, %v104
    %v115 = vsel %vm112, %v110, %v105
    %v116 = vsel %vm112, %v111, %v106
    %vm117 = vcmask 23552
    %v118 = vsel %vm117, %v113, %v93
    %v119 = vsel %vm117, %v114, %v96
    %v120 = vsel %vm117, %v115, %v99
    %v121 = vsel %vm117, %v116, %v102
    %vm122 = vcmask 261120
    %v124 = vsel %vm122, %v29, 0
    %126 = vmatprep.subr.mxu0 0.0
    %127 = vmatpush1.msra.mxu0 0.0
    %128 = vmatprep.subr.mxu0 0.0
    %129 = vmatpush1.msra.mxu0 0.0
    %130 = vmatprep.subr.mxu0 0.0
    %131 = vmatpush1.msra.mxu0 0.0
    %132 = vmatprep.subr.mxu0 0.0
    %133 = vmatpush1.msra.mxu0 0.0
    %134 = vmatprep.subr.mxu0 0.0
    %135 = vmatpush1.msra.mxu0 0.0
    %136 = vmatprep.subr.mxu0 0.0
    %137 = vmatpush1.msra.mxu0 0.0
    %138 = vmatprep.subr.mxu0 0.0
    %139 = vmatpush1.msra.mxu0 0.0
    %140 = vmatprep.subr.mxu0 0.0
    %141 = vmatpush1.msra.mxu0 0.0
    %142 = vmatprep.subr.mxu0 0.0
    %143 = vmatpush1.msra.mxu0 0.0
    %144 = vmatprep.subr.mxu0 0.0
    %145 = vmatpush1.msra.mxu0 0.0
    %146 = vmatprep.subr.mxu0 0.0
    %147 = vmatpush1.msra.mxu0 0.0
    %148 = vmatprep.subr.mxu0 0.0
    %149 = vmatpush1.msra.mxu0 0.0
    %150 = vmatprep.subr.mxu0 0.0
    %151 = vmatpush1.msra.mxu0 %v121
    %152 = vmatprep.subr.mxu0 0.0
    %153 = vmatpush1.msra.mxu0 %v120
    %154 = vmatprep.subr.mxu0 0.0
    %155 = vmatpush1.msra.mxu0 %v119
    %156 = vmatprep.subr.mxu0 0.0
    %157 = vmatpush1.msra.mxu0 %v118
    %158 = vmatprep.subr.mxu0 0.0
    %159 = vmatpush2.msra.mxu0 0.0
    %160 = vmatprep.subr.mxu0 0.0
    %161 = vmatpush2.msra.mxu0 0.0
    %162 = vmatprep.subr.mxu0 0.0
    %163 = vmatpush2.msra.mxu0 0.0
    %164 = vmatprep.subr.mxu0 0.0
    %165 = vmatpush2.msra.mxu0 0.0
    %166 = vmatprep.subr.mxu0 0.0
    %167 = vmatpush2.msra.mxu0 0.0
    %168 = vmatprep.subr.mxu0 0.0
    %169 = vmatpush2.msra.mxu0 0.0
    %170 = vmatprep.subr.mxu0 0.0
    %171 = vmatpush2.msra.mxu0 0.0
    %172 = vmatprep.subr.mxu0 0.0
    %173 = vmatpush2.msra.mxu0 0.0
    %174 = vmatprep.subr.mxu0 0.0
    %175 = vmatpush2.msra.mxu0 0.0
    %176 = vmatprep.subr.mxu0 0.0
    %177 = vmatpush2.msra.mxu0 0.0
    %178 = vmatprep.subr.mxu0 0.0
    %179 = vmatpush2.msra.mxu0 0.0
    %180 = vmatprep.subr.mxu0 0.0
    %181 = vmatpush2.msra.mxu0 0.0
    %182 = vmatprep.subr.mxu0 0.0
    %183 = vmatpush2.msra.mxu0 0.0
    %184 = vmatprep.subr.mxu0 0.0
    %185 = vmatpush2.msra.mxu0 0.0
    %186 = vmatprep.subr.mxu0 0.0
    %187 = vmatpush2.msra.mxu0 0.0
    %188 = vmatprep.subr.mxu0 0.0
    %189 = vmatpush2.msra.mxu0 0.0
    %190 = vmatprep.mubr.f32.mxu0 0.0
    %191 = vmatmul.mubr.f32.gmra.mxu0 %v124
    %v192 = vpop.f32.mrf.mxu0
    %v193 = vadd.f32 0.0, %v192
    %v194 = vpop.f32.mrf.mxu0
    %195 = vdwg.mxu0
    %v196 = vmax.f32 %v193, 0.0
    %v198 = vsel %vm112, %v30, 0
    %v201 = vsel %vm112, %v31, 0
    %v204 = vsel %vm112, %v32, 0
    %v207 = vsel %vm112, %v33, 0
    %vm209 = vcmask 1041408
    %v211 = vsel %vm209, %v196, 0
    %213 = vmatprep.subr.mxu0 0.0
    %214 = vmatpush1.msra.mxu0 0.0
    %215 = vmatprep.subr.mxu0 0.0
    %216 = vmatpush1.msra.mxu0 0.0
    %217 = vmatprep.subr.mxu0 0.0
    %218 = vmatpush1.msra.mxu0 0.0
    %219 = vmatprep.subr.mxu0 0.0
    %220 = vmatpush1.msra.mxu0 0.0
    %221 = vmatprep.subr.mxu0 0.0
    %222 = vmatpush1.msra.mxu0 0.0
    %223 = vmatprep.subr.mxu0 0.0
    %224 = vmatpush1.msra.mxu0 0.0
    %225 = vmatprep.subr.mxu0 0.0
    %226 = vmatpush1.msra.mxu0 0.0
    %227 = vmatprep.subr.mxu0 0.0
    %228 = vmatpush1.msra.mxu0 0.0
    %229 = vmatprep.subr.mxu0 0.0
    %230 = vmatpush1.msra.mxu0 0.0
    %231 = vmatprep.subr.mxu0 0.0
    %232 = vmatpush1.msra.mxu0 0.0
    %233 = vmatprep.subr.mxu0 0.0
    %234 = vmatpush1.msra.mxu0 0.0
    %235 = vmatprep.subr.mxu0 0.0
    %236 = vmatpush1.msra.mxu0 0.0
    %237 = vmatprep.subr.mxu0 0.0
    %238 = vmatpush1.msra.mxu0 0.0
    %239 = vmatprep.subr.mxu0 0.0
    %240 = vmatpush1.msra.mxu0 0.0
    %241 = vmatprep.subr.mxu0 0.0
    %242 = vmatpush1.msra.mxu0 0.0
    %243 = vmatprep.subr.mxu0 0.0
    %244 = vmatpush1.msra.mxu0 %v211
    %245 = vmatprep.subr.mxu0 0.0
    %246 = vmatpush2.msra.mxu0 0.0
    %247 = vmatprep.subr.mxu0 0.0
    %248 = vmatpush2.msra.mxu0 0.0
    %249 = vmatprep.subr.mxu0 0.0
    %250 = vmatpush2.msra.mxu0 0.0
    %251 = vmatprep.subr.mxu0 0.0
    %252 = vmatpush2.msra.mxu0 0.0
    %253 = vmatprep.subr.mxu0 0.0
    %254 = vmatpush2.msra.mxu0 0.0
    %255 = vmatprep.subr.mxu0 0.0
    %256 = vmatpush2.msra.mxu0 0.0
    %257 = vmatprep.subr.mxu0 0.0
    %258 = vmatpush2.msra.mxu0 0.0
    %259 = vmatprep.subr.mxu0 0.0
    %260 = vmatpush2.msra.mxu0 0.0
    %261 = vmatprep.subr.mxu0 0.0
    %262 = vmatpush2.msra.mxu0 0.0
    %263 = vmatprep.subr.mxu0 0.0
    %264 = vmatpush2.msra.mxu0 0.0
    %265 = vmatprep.subr.mxu0 0.0
    %266 = vmatpush2.msra.mxu0 0.0
    %267 = vmatprep.subr.mxu0 0.0
    %268 = vmatpush2.msra.mxu0 0.0
    %269 = vmatprep.subr.mxu0 0.0
    %270 = vmatpush2.msra.mxu0 0.0
    %271 = vmatprep.subr.mxu0 0.0
    %272 = vmatpush2.msra.mxu0 0.0
    %273 = vmatprep.subr.mxu0 0.0
    %274 = vmatpush2.msra.mxu0 0.0
    %275 = vmatprep.subr.mxu0 0.0
    %276 = vmatpush2.msra.mxu0 0.0
    %277 = vmatprep.mubr.f32.mxu0 0.0
    %278 = vmatmul.mubr.f32.gmra.mxu0 %v198
    %v279 = vpop.f32.mrf.mxu0
    %v280 = vadd.f32 0.0, %v279
    %v281 = vpop.f32.mrf.mxu0
    %282 = vmatprep.mubr.f32.mxu0 0.0
    %283 = vmatmul.mubr.f32.gmra.mxu0 %v201
    %v284 = vpop.f32.mrf.mxu0
    %v285 = vadd.f32 0.0, %v284
    %v286 = vpop.f32.mrf.mxu0
    %287 = vmatprep.mubr.f32.mxu0 0.0
    %288 = vmatmul.mubr.f32.gmra.mxu0 %v204
    %v289 = vpop.f32.mrf.mxu0
    %v290 = vadd.f32 0.0, %v289
    %v291 = vpop.f32.mrf.mxu0
    %292 = vmatprep.mubr.f32.mxu0 0.0
    %293 = vmatmul.mubr.f32.gmra.mxu0 %v207
    %v294 = vpop.f32.mrf.mxu0
    %v295 = vadd.f32 0.0, %v294
    %v296 = vpop.f32.mrf.mxu0
    %297 = vdwg.mxu0
    %302 = vrot.lane.b32.xlu0 %v280, 127
    %v303 = vpop.permute.xlu0 %302
    %304 = vrot.lane.b32.xlu0 %v285, 127
    %v305 = vpop.permute.xlu0 %304
    %306 = vrot.lane.b32.xlu0 %v290, 127
    %v307 = vpop.permute.xlu0 %306
    %308 = vrot.lane.b32.xlu0 %v295, 127
    %v309 = vpop.permute.xlu0 %308
    %v314 = vadd.f32 %v280, %v303
    %v315 = vadd.f32 %v285, %v305
    %v316 = vadd.f32 %v290, %v307
    %v317 = vadd.f32 %v295, %v309
    %v318 = vxor.u32 %v314, 2147483648
    %v319 = vxor.u32 %v315, 2147483648
    %v320 = vxor.u32 %v316, 2147483648
    %v321 = vxor.u32 %v317, 2147483648
    %v322 = vmul.f32 %v318, 1.442695
    %v323 = vpow.pop %v322
    %v324 = vmul.f32 %v319, 1.442695
    %v325 = vpow.pop %v324
    %v326 = vmul.f32 %v320, 1.442695
    %v327 = vpow.pop %v326
    %v328 = vmul.f32 %v321, 1.442695
    %v329 = vpow.pop %v328
    %v330 = vadd.f32 %v323, 1.0
    %v331 = vadd.f32 %v325, 1.0
    %v332 = vadd.f32 %v327, 1.0
    %v333 = vadd.f32 %v329, 1.0
    %v334 = vrcp.pop %v330
    %v335 = vmul.f32 1.0, %v334
    %v336 = vrcp.pop %v331
    %v337 = vmul.f32 1.0, %v336
    %v338 = vrcp.pop %v332
    %v339 = vmul.f32 1.0, %v338
    %v340 = vrcp.pop %v333
    %v341 = vmul.f32 1.0, %v340
    %343 = vset.pattern.permute.xlu0 0
    %344 = vperm.xlu0 %343, %v335
    %v345 = vpop.permute.xlu0 %344
    %348 = vset.pattern.permute.xlu0 0
    %349 = vperm.xlu0 %348, %v337
    %v350 = vpop.permute.xlu0 %349
    %353 = vset.pattern.permute.xlu0 0
    %354 = vperm.xlu0 %353, %v339
    %v355 = vpop.permute.xlu0 %354
    %358 = vset.pattern.permute.xlu0 0
    %359 = vperm.xlu0 %358, %v341
    %v360 = vpop.permute.xlu0 %359
    %v362 = vmul.f32 %v34, %v345
    %v363 = vmul.f32 %v35, %v345
    %v364 = vmul.f32 %v36, %v350
    %v365 = vmul.f32 %v37, %v350
    %v366 = vmul.f32 %v38, %v355
    %v367 = vmul.f32 %v39, %v355
    %v368 = vmul.f32 %v40, %v360
    %v369 = vmul.f32 %v41, %v360
    %370 = vst [vmem:[#allocation5] sm:$0xff] %v362
    %371 = vst [vmem:[#allocation5 + $0x8] sm:$0xff] %v363
    %372 = vst [vmem:[#allocation5 + $0x10] sm:$0xff] %v364
    %373 = vst [vmem:[#allocation5 + $0x18] sm:$0xff] %v365
    %374 = vst [vmem:[#allocation5 + $0x20] sm:$0xff] %v366
    %375 = vst [vmem:[#allocation5 + $0x28] sm:$0xff] %v367
    %376 = vst [vmem:[#allocation5 + $0x30] sm:$0xff] %v368
    %377 = vst [vmem:[#allocation5 + $0x38] sm:$0xff] %v369
    %v378 = vld [vmem:[%s70] sm:$0xff]
    %v379 = vld [vmem:[%s70 + $0x8] sm:$0xff]
    %v380 = vld [vmem:[%s70 + $0x10] sm:$0xff]
    %v381 = vld [vmem:[%s70 + $0x18] sm:$0xff]
    %v382 = vld [vmem:[%s70 + $0x20] sm:$0xff]
    %v383 = vld [vmem:[%s70 + $0x28] sm:$0xff]
    %v384 = vld [vmem:[%s70 + $0x30] sm:$0xff]
    %v385 = vld [vmem:[%s70 + $0x38] sm:$0xff]
    %386 = vset.pattern.permute.xlu0 2
    %387 = vperm.xlu0 %386, %v335
    %v388 = vpop.permute.xlu0 %387
    %390 = vset.pattern.permute.xlu0 2
    %391 = vperm.xlu0 %390, %v337
    %v392 = vpop.permute.xlu0 %391
    %394 = vset.pattern.permute.xlu0 2
    %395 = vperm.xlu0 %394, %v339
    %v396 = vpop.permute.xlu0 %395
    %398 = vset.pattern.permute.xlu0 2
    %399 = vperm.xlu0 %398, %v341
    %v400 = vpop.permute.xlu0 %399
    %v402 = vmul.f32 %v378, %v388
    %v403 = vmul.f32 %v379, %v388
    %v404 = vmul.f32 %v380, %v392
    %v405 = vmul.f32 %v381, %v392
    %v406 = vmul.f32 %v382, %v396
    %v407 = vmul.f32 %v383, %v396
    %v408 = vmul.f32 %v384, %v400
    %v409 = vmul.f32 %v385, %v400
    %s410 = scalar_lea.vmem [#allocation5], 64
    %411 = vst [vmem:[%s410] sm:$0xff] %v402
    %412 = vst [vmem:[%s410 + $0x8] sm:$0xff] %v403
    %413 = vst [vmem:[%s410 + $0x10] sm:$0xff] %v404
    %414 = vst [vmem:[%s410 + $0x18] sm:$0xff] %v405
    %415 = vst [vmem:[%s410 + $0x20] sm:$0xff] %v406
    %416 = vst [vmem:[%s410 + $0x28] sm:$0xff] %v407
    %417 = vst [vmem:[%s410 + $0x30] sm:$0xff] %v408
    %418 = vst [vmem:[%s410 + $0x38] sm:$0xff] %v409
    // Predicated region
    $region18: #{tpu_custom_call.1} parent=1 // pred_check
      _
    $region19: #{tpu_custom_call.1} parent=1 // pred_check_branch
      %420 = sbr.rel (0) target = $region21
    $region20: #{tpu_custom_call.1} parent=1 // pred_region
      %s422 = ssub.s32 2048, 2048
      %423 = vsyncadd [#allocation4], %s422
      %s424 = sshll.u32 [#allocation5], 4
      %s425 = int_to_ptr.vmem [resolvable:$true] %s424
      %430 = dma.vmem_to_hbm [thread:$0]  %s425, 2048, %s3, [#allocation4], 256, 256, 16
    $region21: #{tpu_custom_call.1} parent=1 // pred_fallthru
      _
    // Predicated region
    $region22: #{tpu_custom_call.1} parent=1 // pred_check
      _
    $region23: #{tpu_custom_call.1} parent=1 // pred_check_branch
      %432 = sbr.rel (0) target = $region25
    $region24: #{tpu_custom_call.1} parent=1 // pred_region
      %433 = dma.done [#allocation4], 2048
    $region25: #{tpu_custom_call.1} parent=1 // pred_fallthru
      _
    %434 = vsyncpa [#allocation3], 1
    %435 = vsyncpa [#allocation4], 1

</llo_original>
